<compile_context>
chip_gen: v7x
topology: tpu7x:2x2x1
jax: 0.10.0
libtpu: 0.0.40
codegen_flags: <defaults>
</compile_context>

<pallas_src>
import jax
import jax.numpy as jnp
from jax.experimental import pallas as pl
from jax.experimental.pallas import tpu as pltpu


# --------------------------------------------------------------------------- #
# Kernel: processes one chunk of CB batch items, carrying the factored state.
#   inputs : xlin (N, CB)  per-item linear outputs, node-major columns
#            G    (N, N)   factored adjacency state
#            v    (N, 1)   column-scale vector of the factorization
#   outputs: out  (N, CB)  per-item aggregation results (columns)
#            G'   (N, N)   updated state (for chaining chunks)
#            v'   (N, 1)
# --------------------------------------------------------------------------- #
def _gcn_chunk_kernel(xlin_ref, g_ref, v_ref, out_ref, g_out_ref, v_out_ref):
    N = g_ref.shape[0]
    CB = xlin_ref.shape[1]

    # Hoisted loop invariants: thin iotas broadcast-compared into the diag mask
    # (never materialized as an int32 NxN temporary).
    row = jax.lax.broadcasted_iota(jnp.int32, (N, 1), 0)
    col = jax.lax.broadcasted_iota(jnp.int32, (1, N), 1)
    diag = row == col

    for i in range(CB):                    # static unroll; CB is small
        G = g_ref[...] if i == 0 else g_out_ref[...]
        v = v_ref[...] if i == 0 else v_out_ref[...]

        # fixdiag in factored form: only the off-diagonal of G matters.
        Go = jnp.where(diag, jnp.float32(0.0), G)

        # deg = rowsum(H with unit diagonal) = offdiag(G) @ v + 1  -> MXU.
        deg = jnp.dot(Go, v, preferred_element_type=jnp.float32) + 1.0
        deg = jnp.maximum(deg, 0.0)                               # deg[deg<0] = 0
        dinv = jnp.where(deg > 0.0, jax.lax.rsqrt(deg), 0.0)      # inf -> 0

        # diag(dinv) @ Hm @ diag(dinv), factored: row-scale G, fold the column
        # scale into v.  (Diagonal of the true H_new is dinv^2; it is only
        # needed for this item's output, the next fixdiag discards it.)
        G_new = dinv * Go                                         # (N,1)*(N,N)
        v_new = v * dinv
        g_out_ref[...] = G_new
        v_out_ref[...] = v_new

        # out_i = H_new @ x_i = G_new @ (v_new * x_i) + dinv^2 * x_i  -> MXU.
        x = xlin_ref[:, i:i + 1]                                  # (N,1) static slice
        out_ref[:, i:i + 1] = (
            jnp.dot(G_new, v_new * x, preferred_element_type=jnp.float32)
            + (dinv * dinv) * x
        )


def _vmem_capacity_bytes():
    """Physical per-core VMEM; conservative 64 MiB (v7x) if the query fails."""
    try:
        cap = int(pltpu.get_tpu_info().vmem_capacity_bytes)
        if cap > 0:
            return cap
    except Exception:
        pass
    return 64 * 1024 * 1024


def _run_chunk(x_chunk, G, v, vmem_limit):
    N, CB = x_chunk.shape
    return pl.pallas_call(
        _gcn_chunk_kernel,
        out_shape=(
            jax.ShapeDtypeStruct((N, CB), jnp.float32),
            jax.ShapeDtypeStruct((N, N), jnp.float32),
            jax.ShapeDtypeStruct((N, 1), jnp.float32),
        ),
        compiler_params=pltpu.CompilerParams(vmem_limit_bytes=int(vmem_limit)),
    )(x_chunk, G, v)


def _gcn_forward_xla(x_nb, H):
    """Pure-XLA fallback for N too large for the VMEM-resident kernel."""
    N, _ = x_nb.shape
    eye = jnp.eye(N, dtype=jnp.float32)

    def step(Hc, xcol):
        Hm = jnp.where(eye > 0.0, 1.0, Hc)
        deg = jnp.maximum(jnp.sum(Hm, axis=1), 0.0)
        dinv = jnp.where(deg > 0.0, jax.lax.rsqrt(deg), 0.0)
        Hn = Hm * dinv[:, None] * dinv[None, :]
        return Hn, Hn @ xcol

    _, outs = jax.lax.scan(step, jnp.asarray(H, jnp.float32), jnp.transpose(x_nb))
    return outs                                                    # (B, N)


def gcn_forward(X_b, H, Wt, b, *, chunk=16):
    """X_b: [B, N, 64], H: [N, N], Wt: [64, 1], b: [1, 1] -> output [B, N]."""
    B, N, F = X_b.shape
    w_vec = jnp.asarray(Wt, jnp.float32).reshape(F)
    bias = jnp.asarray(b, jnp.float32).reshape(())

    # Linear(64,1) hoisted out of the serial loop; emitted node-major (N, B) so
    # per-item columns feed the kernel's MXU dot with no relayout.
    x_nb = jnp.einsum("bnf,f->nb", jnp.asarray(X_b, jnp.float32), w_vec) + bias

    G = jnp.asarray(H, jnp.float32)
    v = jnp.ones((N, 1), jnp.float32)

    cap = _vmem_capacity_bytes()
    cb_max = max(1, min(chunk, B))
    # working set ~ G in + G out + ~2 NxN temporaries + xlin/out chunk + slack
    need = 4 * N * N * 4 + 4 * N * cb_max * 4 + (1 << 20)
    if need > int(0.85 * cap):
        # TODO(synk): row-tiled streaming Pallas kernel for very large N.
        return _gcn_forward_xla(x_nb, G)
    vmem_limit = min(int(0.9 * cap), max(need + (8 << 20), 32 << 20))

    outs = []
    for s in range(0, B, chunk):
        cb = min(chunk, B - s)
        out_c, G, v = _run_chunk(x_nb[:, s:s + cb], G, v, vmem_limit)
        outs.append(out_c)
    out_nb = outs[0] if len(outs) == 1 else jnp.concatenate(outs, axis=1)
    return jnp.transpose(out_nb)                                   # (B, N)


# --------------------------------------------------------------------------- #
# Pure-JAX mirror of the PyTorch loop, for validation.
# --------------------------------------------------------------------------- #
def gcn_reference(X_b, H, Wt, b):
    B, N, _ = X_b.shape
    eye = jnp.eye(N, dtype=jnp.float32)
    Hc = jnp.asarray(H, jnp.float32)
    Wt = jnp.asarray(Wt, jnp.float32)
    b = jnp.asarray(b, jnp.float32).reshape(1, 1)
    outs = []
    for i in range(B):
        x_lin = jnp.asarray(X_b[i], jnp.float32) @ Wt + b
        Hm = Hc * (eye == 0).astype(jnp.float32) + eye
        deg = jnp.sum(Hm, axis=1)
        deg = jnp.where(deg < 0.0, 0.0, deg)
        dinv = jnp.where(deg > 0.0, 1.0 / jnp.sqrt(deg), 0.0)
        D = dinv[:, None] * eye
        Hc = D @ Hm @ D
        outs.append((Hc @ x_lin).reshape(-1))
    return jnp.stack(outs, axis=0)


if __name__ == "__main__":
    key = jax.random.PRNGKey(0)

    def make_case(k, B, N, F):
        kx, kh, kw, kb = jax.random.split(k, 4)
        X_b = jax.random.normal(kx, (B, N, F), dtype=jnp.float32)
        H = jax.random.uniform(kh, (N, N), dtype=jnp.float32)         # adjacency-like
        W = jax.random.normal(kw, (1, F), dtype=jnp.float32) * 0.1    # Linear(64,1).weight
        bias = jax.random.normal(kb, (1,), dtype=jnp.float32) * 0.1   # Linear(64,1).bias
        return X_b, H, W.T, bias.reshape(1, 1)

    k1, k2 = jax.random.split(key)

    # Case 1: module-typical small shapes, single fused kernel invocation.
    X_b, H, Wt, b = make_case(k1, B=2, N=16, F=64)
    ref = gcn_reference(X_b, H, Wt, b)
    out = jax.block_until_ready(gcn_forward(X_b, H, Wt, b))
    assert out.shape == (2, 16)
    assert jnp.allclose(out, ref, rtol=2e-3, atol=2e-3), "case 1 mismatch"

    # Case 2: same inputs through the chunk-chained path (state threaded
    # between two pallas_calls).
    out_chained = jax.block_until_ready(gcn_forward(X_b, H, Wt, b, chunk=1))
    assert jnp.allclose(out_chained, ref, rtol=2e-3, atol=2e-3), "case 2 mismatch"

    # Case 3: uneven chunks + rows with negative sums (exercises the deg<=0 /
    # dead-row guard, which the factored update handles exactly).
    X_b, H, Wt, b = make_case(k2, B=5, N=32, F=64)
    H = H.at[:3, :].set(-0.5)
    ref = gcn_reference(X_b, H, Wt, b)
    out = jax.block_until_ready(gcn_forward(X_b, H, Wt, b, chunk=2))
    assert out.shape == (5, 32)
    assert jnp.allclose(out, ref, rtol=2e-3, atol=2e-3), "case 3 mismatch"

    print("KERNEL_OK")
</pallas_src>

<mosaic_0001>
module attributes {stable_mosaic.version = 11 : i64} {
  func.func @_gcn_chunk_kernel(%arg0: memref<16x2xf32, #tpu.memory_space<vmem>>, %arg1: memref<16x16xf32, #tpu.memory_space<vmem>>, %arg2: memref<16x1xf32, #tpu.memory_space<vmem>>, %arg3: memref<16x2xf32, #tpu.memory_space<vmem>>, %arg4: memref<16x16xf32, #tpu.memory_space<vmem>>, %arg5: memref<16x1xf32, #tpu.memory_space<vmem>>) attributes {dimension_semantics = [], scalar_prefetch = 0 : i64, scratch_operands = 0 : i64, tpu.core_type = #tpu.core_type<tc>} {
    %0 = tpu.iota {dimensions = array<i32: 0>} : vector<16x1xi32>
    %1 = tpu.iota {dimensions = array<i32: 1>} : vector<1x16xi32>
    %2 = vector.broadcast %0 : vector<16x1xi32> to vector<16x16xi32>
    %3 = vector.broadcast %1 : vector<1x16xi32> to vector<16x16xi32>
    %4 = arith.cmpi eq, %2, %3 : vector<16x16xi32>
    %c0 = arith.constant 0 : index
    %c0_0 = arith.constant 0 : index
    %5 = vector.load %arg1[%c0, %c0_0] : memref<16x16xf32, #tpu.memory_space<vmem>>, vector<16x16xf32>
    %c0_1 = arith.constant 0 : index
    %c0_2 = arith.constant 0 : index
    %6 = vector.load %arg2[%c0_1, %c0_2] : memref<16x1xf32, #tpu.memory_space<vmem>>, vector<16x1xf32>
    %cst = arith.constant 0.000000e+00 : f32
    %7 = vector.broadcast %cst : f32 to vector<16x16xf32>
    %8 = arith.select %4, %7, %5 : vector<16x16xi1>, vector<16x16xf32>
    %cst_3 = arith.constant dense<0.000000e+00> : vector<16x1xf32>
    %9 = tpu.matmul %8, %6, %cst_3 {dimension_numbers = #tpu.dot_dimension_numbers<[1], [0], [0], [1], [0, 0, 1, 1], [], []>} : vector<16x16xf32>, vector<16x1xf32>, vector<16x1xf32> -> vector<16x1xf32>
    %cst_4 = arith.constant 1.000000e+00 : f32
    %10 = vector.broadcast %cst_4 : f32 to vector<16x1xf32>
    %11 = arith.addf %9, %10 : vector<16x1xf32>
    %cst_5 = arith.constant 0.000000e+00 : f32
    %12 = vector.broadcast %cst_5 : f32 to vector<16x1xf32>
    %13 = arith.maximumf %11, %12 : vector<16x1xf32>
    %cst_6 = arith.constant 0.000000e+00 : f32
    %14 = vector.broadcast %cst_6 : f32 to vector<16x1xf32>
    %15 = arith.cmpf ogt, %13, %14 : vector<16x1xf32>
    %16 = math.rsqrt %13 : vector<16x1xf32>
    %cst_7 = arith.constant 0.000000e+00 : f32
    %17 = vector.broadcast %cst_7 : f32 to vector<16x1xf32>
    %18 = arith.select %15, %16, %17 : vector<16x1xi1>, vector<16x1xf32>
    %19 = vector.broadcast %18 : vector<16x1xf32> to vector<16x16xf32>
    %20 = arith.mulf %19, %8 : vector<16x16xf32>
    %21 = arith.mulf %6, %18 : vector<16x1xf32>
    %c0_8 = arith.constant 0 : index
    %c0_9 = arith.constant 0 : index
    %22 = vector.load %arg4[%c0_8, %c0_9] : memref<16x16xf32, #tpu.memory_space<vmem>>, vector<16x16xf32>
    tpu.vector_store %arg4[%c0_8, %c0_9], %20 {strides = array<i32>} : memref<16x16xf32, #tpu.memory_space<vmem>>, vector<16x16xf32>,
    %c0_10 = arith.constant 0 : index
    %c0_11 = arith.constant 0 : index
    %23 = vector.load %arg5[%c0_10, %c0_11] : memref<16x1xf32, #tpu.memory_space<vmem>>, vector<16x1xf32>
    tpu.vector_store %arg5[%c0_10, %c0_11], %21 {strides = array<i32>} : memref<16x1xf32, #tpu.memory_space<vmem>>, vector<16x1xf32>,
    %c0_12 = arith.constant 0 : index
    %c0_13 = arith.constant 0 : index
    %24 = vector.load %arg0[%c0_12, %c0_13] : memref<16x2xf32, #tpu.memory_space<vmem>>, vector<16x1xf32>
    %25 = arith.mulf %21, %24 : vector<16x1xf32>
    %cst_14 = arith.constant dense<0.000000e+00> : vector<16x1xf32>
    %26 = tpu.matmul %20, %25, %cst_14 {dimension_numbers = #tpu.dot_dimension_numbers<[1], [0], [0], [1], [0, 0, 1, 1], [], []>} : vector<16x16xf32>, vector<16x1xf32>, vector<16x1xf32> -> vector<16x1xf32>
    %27 = arith.mulf %18, %18 : vector<16x1xf32>
    %28 = arith.mulf %27, %24 : vector<16x1xf32>
    %29 = arith.addf %26, %28 : vector<16x1xf32>
    %c0_15 = arith.constant 0 : index
    %c0_16 = arith.constant 0 : index
    %30 = vector.load %arg3[%c0_15, %c0_16] : memref<16x2xf32, #tpu.memory_space<vmem>>, vector<16x1xf32>
    tpu.vector_store %arg3[%c0_15, %c0_16], %29 {strides = array<i32>} : memref<16x2xf32, #tpu.memory_space<vmem>>, vector<16x1xf32>,
    %c0_17 = arith.constant 0 : index
    %c0_18 = arith.constant 0 : index
    %31 = vector.load %arg4[%c0_17, %c0_18] : memref<16x16xf32, #tpu.memory_space<vmem>>, vector<16x16xf32>
    %c0_19 = arith.constant 0 : index
    %c0_20 = arith.constant 0 : index
    %32 = vector.load %arg5[%c0_19, %c0_20] : memref<16x1xf32, #tpu.memory_space<vmem>>, vector<16x1xf32>
    %cst_21 = arith.constant 0.000000e+00 : f32
    %33 = vector.broadcast %cst_21 : f32 to vector<16x16xf32>
    %34 = arith.select %4, %33, %31 : vector<16x16xi1>, vector<16x16xf32>
    %cst_22 = arith.constant dense<0.000000e+00> : vector<16x1xf32>
    %35 = tpu.matmul %34, %32, %cst_22 {dimension_numbers = #tpu.dot_dimension_numbers<[1], [0], [0], [1], [0, 0, 1, 1], [], []>} : vector<16x16xf32>, vector<16x1xf32>, vector<16x1xf32> -> vector<16x1xf32>
    %cst_23 = arith.constant 1.000000e+00 : f32
    %36 = vector.broadcast %cst_23 : f32 to vector<16x1xf32>
    %37 = arith.addf %35, %36 : vector<16x1xf32>
    %cst_24 = arith.constant 0.000000e+00 : f32
    %38 = vector.broadcast %cst_24 : f32 to vector<16x1xf32>
    %39 = arith.maximumf %37, %38 : vector<16x1xf32>
    %cst_25 = arith.constant 0.000000e+00 : f32
    %40 = vector.broadcast %cst_25 : f32 to vector<16x1xf32>
    %41 = arith.cmpf ogt, %39, %40 : vector<16x1xf32>
    %42 = math.rsqrt %39 : vector<16x1xf32>
    %cst_26 = arith.constant 0.000000e+00 : f32
    %43 = vector.broadcast %cst_26 : f32 to vector<16x1xf32>
    %44 = arith.select %41, %42, %43 : vector<16x1xi1>, vector<16x1xf32>
    %45 = vector.broadcast %44 : vector<16x1xf32> to vector<16x16xf32>
    %46 = arith.mulf %45, %34 : vector<16x16xf32>
    %47 = arith.mulf %32, %44 : vector<16x1xf32>
    %c0_27 = arith.constant 0 : index
    %c0_28 = arith.constant 0 : index
    %48 = vector.load %arg4[%c0_27, %c0_28] : memref<16x16xf32, #tpu.memory_space<vmem>>, vector<16x16xf32>
    tpu.vector_store %arg4[%c0_27, %c0_28], %46 {strides = array<i32>} : memref<16x16xf32, #tpu.memory_space<vmem>>, vector<16x16xf32>,
    %c0_29 = arith.constant 0 : index
    %c0_30 = arith.constant 0 : index
    %49 = vector.load %arg5[%c0_29, %c0_30] : memref<16x1xf32, #tpu.memory_space<vmem>>, vector<16x1xf32>
    tpu.vector_store %arg5[%c0_29, %c0_30], %47 {strides = array<i32>} : memref<16x1xf32, #tpu.memory_space<vmem>>, vector<16x1xf32>,
    %c0_31 = arith.constant 0 : index
    %c1 = arith.constant 1 : index
    %50 = vector.load %arg0[%c0_31, %c1] : memref<16x2xf32, #tpu.memory_space<vmem>>, vector<16x1xf32>
    %51 = arith.mulf %47, %50 : vector<16x1xf32>
    %cst_32 = arith.constant dense<0.000000e+00> : vector<16x1xf32>
    %52 = tpu.matmul %46, %51, %cst_32 {dimension_numbers = #tpu.dot_dimension_numbers<[1], [0], [0], [1], [0, 0, 1, 1], [], []>} : vector<16x16xf32>, vector<16x1xf32>, vector<16x1xf32> -> vector<16x1xf32>
    %53 = arith.mulf %44, %44 : vector<16x1xf32>
    %54 = arith.mulf %53, %50 : vector<16x1xf32>
    %55 = arith.addf %52, %54 : vector<16x1xf32>
    %c0_33 = arith.constant 0 : index
    %c1_34 = arith.constant 1 : index
    %56 = vector.load %arg3[%c0_33, %c1_34] : memref<16x2xf32, #tpu.memory_space<vmem>>, vector<16x1xf32>
    tpu.vector_store %arg3[%c0_33, %c1_34], %55 {strides = array<i32>} : memref<16x2xf32, #tpu.memory_space<vmem>>, vector<16x1xf32>,
    return
  }
}

</mosaic_0001>

<llo_original>
// kernel: tpu_custom_call.1
$region0: #{tpu_custom_call.1}
  #allocation0 [shape = 'u32[]', space=smem, size = 0x4, offset = 0x4, fixed_abs, tag = 'smem constant byte address 0x4 - core index']
  #allocation1 [shape = 'u32[144,128]{1,0:T(1,128)}', space=vmem, size = 0x12000, scoped, tag = 'internal scratch']
  %s0 = inlined_call_operand.vmem [shape: f32[16,2], index: 0, kind: input, shape index: {}]
  %s1 = inlined_call_operand.vmem [shape: f32[16,16], index: 1, kind: input, shape index: {}]
  %s2 = inlined_call_operand.vmem [shape: f32[16,1], index: 2, kind: input, shape index: {}]
  %s3 = inlined_call_operand.vmem [shape: f32[16,2], index: 3, kind: output, shape index: {0}]
  %s4 = inlined_call_operand.hbm [shape: f32[16,16], index: 4, kind: output, shape index: {1}]
  %s5 = inlined_call_operand.vmem [shape: f32[16,1], index: 5, kind: output, shape index: {2}]
  %6 = xla_tuple %s3, %s4, %s5
  %s7 = sld [smem:[#allocation0]]
  $region38: #{tpu_custom_call.1} parent=0
    _
  %s9 = ssub.s32 1, %s7
  %s10 = scalar_select 0, %s9, %s7
  $region1: #{tpu_custom_call.1} parent=0
    #allocation2 [shape = 'u8[8192]{0}', space=vmem, size = 0x2000, scoped, tag = 'output window, operand 1, single buffered']
    #allocation3 [shape = 's32[1]{0}', space=sflag, size = 0x4, scoped, tag = 'scoped memory for tpu_custom_call.1']
    %11 = vsyncpa [#allocation3], 0
    // Predicated region
    $region2: #{tpu_custom_call.1} parent=1 // pred_check
      _
    $region3: #{tpu_custom_call.1} parent=1 // pred_check_branch
      %13 = sbr.rel (0) target = $region5
    $region4: #{tpu_custom_call.1} parent=1 // pred_region
      _
    $region5: #{tpu_custom_call.1} parent=1 // pred_fallthru
      _
    // Predicated region
    $region6: #{tpu_custom_call.1} parent=1 // pred_check
      _
    $region7: #{tpu_custom_call.1} parent=1 // pred_check_branch
      %15 = sbr.rel (0) target = $region9
    $region8: #{tpu_custom_call.1} parent=1 // pred_region
      _
    $region9: #{tpu_custom_call.1} parent=1 // pred_fallthru
      _
    // Predicated region
    $region10: #{tpu_custom_call.1} parent=1 // pred_check
      _
    $region11: #{tpu_custom_call.1} parent=1 // pred_check_branch
      %17 = sbr.rel (0) target = $region13
    $region12: #{tpu_custom_call.1} parent=1 // pred_region
      _
    $region13: #{tpu_custom_call.1} parent=1 // pred_fallthru
      _
    %v18 = vlaneseq
    %v19 = vshrl.u32 %v18, 7
    %v20 = vadd.s32 %v19, 8
    %v21 = vlaneseq
    %v22 = vand.u32 %v21, 127
    %vm23 = vcmp.eq.s32.totalorder %v19, %v22
    %vm24 = vcmp.eq.s32.totalorder %v20, %v22
    %v25 = vld [vmem:[%s1] sm:$0xff]
    %v26 = vld [vmem:[%s1 + $0x8] sm:$0xff]
    %v27 = vld [vmem:[%s2] sm:$0xff]
    %v28 = vld [vmem:[%s2 + $0x8] sm:$0xff]
    %v29 = vsel %vm23, 0.0, %v25
    %v30 = vsel %vm24, 0.0, %v26
    %vm31 = vcmask 130048
    %v33 = vsel %vm31, %v29, 0
    %v36 = vsel %vm31, %v30, 0
    %38 = vmatprep.subr.mxu0 0.0
    %39 = vmatpush1.msra.mxu0 %v27
    %40 = vmatprep.subr.mxu0 0.0
    %41 = vmatpush1.msra.mxu0 %v28
    %42 = vmatprep.subr.mxu0 0.0
    %43 = vmatpush1.msra.mxu0 0.0
    %44 = vmatprep.subr.mxu0 0.0
    %45 = vmatpush1.msra.mxu0 0.0
    %46 = vmatprep.subr.mxu0 0.0
    %47 = vmatpush1.msra.mxu0 0.0
    %48 = vmatprep.subr.mxu0 0.0
    %49 = vmatpush1.msra.mxu0 0.0
    %50 = vmatprep.subr.mxu0 0.0
    %51 = vmatpush1.msra.mxu0 0.0
    %52 = vmatprep.subr.mxu0 0.0
    %53 = vmatpush1.msra.mxu0 0.0
    %54 = vmatprep.subr.mxu0 0.0
    %55 = vmatpush1.msra.mxu0 0.0
    %56 = vmatprep.subr.mxu0 0.0
    %57 = vmatpush1.msra.mxu0 0.0
    %58 = vmatprep.subr.mxu0 0.0
    %59 = vmatpush1.msra.mxu0 0.0
    %60 = vmatprep.subr.mxu0 0.0
    %61 = vmatpush1.msra.mxu0 0.0
    %62 = vmatprep.subr.mxu0 0.0
    %63 = vmatpush1.msra.mxu0 0.0
    %64 = vmatprep.subr.mxu0 0.0
    %65 = vmatpush1.msra.mxu0 0.0
    %66 = vmatprep.subr.mxu0 0.0
    %67 = vmatpush1.msra.mxu0 0.0
    %68 = vmatprep.subr.mxu0 0.0
    %69 = vmatpush1.msra.mxu0 0.0
    %70 = vmatprep.subr.mxu0 0.0
    %71 = vmatpush1.msra.mxu0 0.0
    %72 = vmatprep.subr.mxu0 0.0
    %73 = vmatpush1.msra.mxu0 0.0
    %74 = vmatprep.subr.mxu0 0.0
    %75 = vmatpush1.msra.mxu0 0.0
    %76 = vmatprep.subr.mxu0 0.0
    %77 = vmatpush1.msra.mxu0 0.0
    %78 = vmatprep.subr.mxu0 0.0
    %79 = vmatpush1.msra.mxu0 0.0
    %80 = vmatprep.subr.mxu0 0.0
    %81 = vmatpush1.msra.mxu0 0.0
    %82 = vmatprep.subr.mxu0 0.0
    %83 = vmatpush1.msra.mxu0 0.0
    %84 = vmatprep.subr.mxu0 0.0
    %85 = vmatpush1.msra.mxu0 0.0
    %86 = vmatprep.subr.mxu0 0.0
    %87 = vmatpush1.msra.mxu0 0.0
    %88 = vmatprep.subr.mxu0 0.0
    %89 = vmatpush1.msra.mxu0 0.0
    %90 = vmatprep.subr.mxu0 0.0
    %91 = vmatpush1.msra.mxu0 0.0
    %92 = vmatprep.subr.mxu0 0.0
    %93 = vmatpush1.msra.mxu0 0.0
    %94 = vmatprep.subr.mxu0 0.0
    %95 = vmatpush1.msra.mxu0 0.0
    %96 = vmatprep.subr.mxu0 0.0
    %97 = vmatpush1.msra.mxu0 0.0
    %98 = vmatprep.subr.mxu0 0.0
    %99 = vmatpush1.msra.mxu0 0.0
    %100 = vmatprep.subr.mxu0 0.0
    %101 = vmatpush1.msra.mxu0 0.0
    %102 = vmatprep.mubr.f32.mxu0 0.0
    %103 = vmatmul.mubr.f32.gmra.mrb[0].mxu0 %v33
    %v104 = vpop.f32.mrb[0].mxu0
    %v105 = vadd.f32 1.0, %v104
    %v106 = vpop.f32.mrb[0].mxu0
    %107 = vmatprep.mubr.f32.mxu0 0.0
    %108 = vmatmul.mubr.f32.gmra.mrb[0].mxu0 %v36
    %v109 = vpop.f32.mrb[0].mxu0
    %v110 = vadd.f32 1.0, %v109
    %v111 = vpop.f32.mrb[0].mxu0
    %112 = vdwg.mxu0
    %v113 = vmax.f32 %v105, 0.0
    %v114 = vmax.f32 %v110, 0.0
    %vm115 = vcmp.gt.f32.partialorder %v113, 0.0
    %vm116 = vcmp.gt.f32.partialorder %v114, 0.0
    %v117 = vrsqrt.pop %v113
    %v118 = vrsqrt.pop %v114
    %v119 = vsel %vm115, %v117, 0.0
    %v120 = vsel %vm116, %v118, 0.0
    %122 = vset.pattern.permute.xlu0 0
    %123 = vperm.xlu0 %122, %v119
    %v124 = vpop.permute.xlu0 %123
    %127 = vset.pattern.permute.xlu0 0
    %128 = vperm.xlu0 %127, %v120
    %v129 = vpop.permute.xlu0 %128
    %v131 = vmul.f32 %v124, %v29
    %v132 = vmul.f32 %v129, %v30
    %v133 = vmul.f32 %v27, %v119
    %v134 = vmul.f32 %v28, %v120
    %135 = vst.msk [vmem:[#allocation2] sm:$0xff] %vm31, %v131
    %136 = vst.msk [vmem:[#allocation2 + $0x8] sm:$0xff] %vm31, %v132
    %vm137 = vcmask 7168
    %138 = vst.msk [vmem:[%s5] sm:$0xff] %vm137, %v133
    %139 = vst.msk [vmem:[%s5 + $0x8] sm:$0xff] %vm137, %v134
    %v140 = vld [vmem:[%s0] sm:$0xff]
    %v141 = vld [vmem:[%s0 + $0x8] sm:$0xff]
    %v142 = vmul.f32 %v133, %v140
    %v143 = vmul.f32 %v134, %v141
    %v144 = vmul.f32 %v119, %v119
    %v145 = vmul.f32 %v120, %v120
    %v146 = vmul.f32 %v144, %v140
    %v147 = vmul.f32 %v145, %v141
    %v149 = vsel %vm31, %v131, 0
    %v152 = vsel %vm31, %v132, 0
    %154 = vmatprep.subr.mxu0 0.0
    %155 = vmatpush1.msra.mxu0 %v142
    %156 = vmatprep.subr.mxu0 0.0
    %157 = vmatpush1.msra.mxu0 %v143
    %158 = vmatprep.subr.mxu0 0.0
    %159 = vmatpush1.msra.mxu0 0.0
    %160 = vmatprep.subr.mxu0 0.0
    %161 = vmatpush1.msra.mxu0 0.0
    %162 = vmatprep.subr.mxu0 0.0
    %163 = vmatpush1.msra.mxu0 0.0
    %164 = vmatprep.subr.mxu0 0.0
    %165 = vmatpush1.msra.mxu0 0.0
    %166 = vmatprep.subr.mxu0 0.0
    %167 = vmatpush1.msra.mxu0 0.0
    %168 = vmatprep.subr.mxu0 0.0
    %169 = vmatpush1.msra.mxu0 0.0
    %170 = vmatprep.subr.mxu0 0.0
    %171 = vmatpush1.msra.mxu0 0.0
    %172 = vmatprep.subr.mxu0 0.0
    %173 = vmatpush1.msra.mxu0 0.0
    %174 = vmatprep.subr.mxu0 0.0
    %175 = vmatpush1.msra.mxu0 0.0
    %176 = vmatprep.subr.mxu0 0.0
    %177 = vmatpush1.msra.mxu0 0.0
    %178 = vmatprep.subr.mxu0 0.0
    %179 = vmatpush1.msra.mxu0 0.0
    %180 = vmatprep.subr.mxu0 0.0
    %181 = vmatpush1.msra.mxu0 0.0
    %182 = vmatprep.subr.mxu0 0.0
    %183 = vmatpush1.msra.mxu0 0.0
    %184 = vmatprep.subr.mxu0 0.0
    %185 = vmatpush1.msra.mxu0 0.0
    %186 = vmatprep.subr.mxu0 0.0
    %187 = vmatpush1.msra.mxu0 0.0
    %188 = vmatprep.subr.mxu0 0.0
    %189 = vmatpush1.msra.mxu0 0.0
    %190 = vmatprep.subr.mxu0 0.0
    %191 = vmatpush1.msra.mxu0 0.0
    %192 = vmatprep.subr.mxu0 0.0
    %193 = vmatpush1.msra.mxu0 0.0
    %194 = vmatprep.subr.mxu0 0.0
    %195 = vmatpush1.msra.mxu0 0.0
    %196 = vmatprep.subr.mxu0 0.0
    %197 = vmatpush1.msra.mxu0 0.0
    %198 = vmatprep.subr.mxu0 0.0
    %199 = vmatpush1.msra.mxu0 0.0
    %200 = vmatprep.subr.mxu0 0.0
    %201 = vmatpush1.msra.mxu0 0.0
    %202 = vmatprep.subr.mxu0 0.0
    %203 = vmatpush1.msra.mxu0 0.0
    %204 = vmatprep.subr.mxu0 0.0
    %205 = vmatpush1.msra.mxu0 0.0
    %206 = vmatprep.subr.mxu0 0.0
    %207 = vmatpush1.msra.mxu0 0.0
    %208 = vmatprep.subr.mxu0 0.0
    %209 = vmatpush1.msra.mxu0 0.0
    %210 = vmatprep.subr.mxu0 0.0
    %211 = vmatpush1.msra.mxu0 0.0
    %212 = vmatprep.subr.mxu0 0.0
    %213 = vmatpush1.msra.mxu0 0.0
    %214 = vmatprep.subr.mxu0 0.0
    %215 = vmatpush1.msra.mxu0 0.0
    %216 = vmatprep.subr.mxu0 0.0
    %217 = vmatpush1.msra.mxu0 0.0
    %218 = vmatprep.mubr.f32.mxu0 0.0
    %219 = vmatmul.mubr.f32.gmra.mrb[0].mxu0 %v149
    %v220 = vpop.f32.mrb[0].mxu0
    %v221 = vadd.f32 %v146, %v220
    %v222 = vpop.f32.mrb[0].mxu0
    %223 = vmatprep.mubr.f32.mxu0 0.0
    %224 = vmatmul.mubr.f32.gmra.mrb[0].mxu0 %v152
    %v225 = vpop.f32.mrb[0].mxu0
    %v226 = vadd.f32 %v147, %v225
    %v227 = vpop.f32.mrb[0].mxu0
    %228 = vdwg.mxu0
    %229 = vst.msk [vmem:[%s3] sm:$0xff] %vm137, %v221
    %230 = vst.msk [vmem:[%s3 + $0x8] sm:$0xff] %vm137, %v226
    %v231 = vld [vmem:[#allocation2] sm:$0xff]
    %v232 = vld [vmem:[#allocation2 + $0x8] sm:$0xff]
    %v233 = vld [vmem:[%s5] sm:$0xff]
    %v234 = vld [vmem:[%s5 + $0x8] sm:$0xff]
    %v235 = vsel %vm23, 0.0, %v231
    %v236 = vsel %vm24, 0.0, %v232
    %v238 = vsel %vm31, %v235, 0
    %v241 = vsel %vm31, %v236, 0
    %243 = vmatprep.subr.mxu0 0.0
    %244 = vmatpush1.msra.mxu0 %v233
    %245 = vmatprep.subr.mxu0 0.0
    %246 = vmatpush1.msra.mxu0 %v234
    %247 = vmatprep.subr.mxu0 0.0
    %248 = vmatpush1.msra.mxu0 0.0
    %249 = vmatprep.subr.mxu0 0.0
    %250 = vmatpush1.msra.mxu0 0.0
    %251 = vmatprep.subr.mxu0 0.0
    %252 = vmatpush1.msra.mxu0 0.0
    %253 = vmatprep.subr.mxu0 0.0
    %254 = vmatpush1.msra.mxu0 0.0
    %255 = vmatprep.subr.mxu0 0.0
    %256 = vmatpush1.msra.mxu0 0.0
    %257 = vmatprep.subr.mxu0 0.0
    %258 = vmatpush1.msra.mxu0 0.0
    %259 = vmatprep.subr.mxu0 0.0
    %260 = vmatpush1.msra.mxu0 0.0
    %261 = vmatprep.subr.mxu0 0.0
    %262 = vmatpush1.msra.mxu0 0.0
    %263 = vmatprep.subr.mxu0 0.0
    %264 = vmatpush1.msra.mxu0 0.0
    %265 = vmatprep.subr.mxu0 0.0
    %266 = vmatpush1.msra.mxu0 0.0
    %267 = vmatprep.subr.mxu0 0.0
    %268 = vmatpush1.msra.mxu0 0.0
    %269 = vmatprep.subr.mxu0 0.0
    %270 = vmatpush1.msra.mxu0 0.0
    %271 = vmatprep.subr.mxu0 0.0
    %272 = vmatpush1.msra.mxu0 0.0
    %273 = vmatprep.subr.mxu0 0.0
    %274 = vmatpush1.msra.mxu0 0.0
    %275 = vmatprep.subr.mxu0 0.0
    %276 = vmatpush1.msra.mxu0 0.0
    %277 = vmatprep.subr.mxu0 0.0
    %278 = vmatpush1.msra.mxu0 0.0
    %279 = vmatprep.subr.mxu0 0.0
    %280 = vmatpush1.msra.mxu0 0.0
    %281 = vmatprep.subr.mxu0 0.0
    %282 = vmatpush1.msra.mxu0 0.0
    %283 = vmatprep.subr.mxu0 0.0
    %284 = vmatpush1.msra.mxu0 0.0
    %285 = vmatprep.subr.mxu0 0.0
    %286 = vmatpush1.msra.mxu0 0.0
    %287 = vmatprep.subr.mxu0 0.0
    %288 = vmatpush1.msra.mxu0 0.0
    %289 = vmatprep.subr.mxu0 0.0
    %290 = vmatpush1.msra.mxu0 0.0
    %291 = vmatprep.subr.mxu0 0.0
    %292 = vmatpush1.msra.mxu0 0.0
    %293 = vmatprep.subr.mxu0 0.0
    %294 = vmatpush1.msra.mxu0 0.0
    %295 = vmatprep.subr.mxu0 0.0
    %296 = vmatpush1.msra.mxu0 0.0
    %297 = vmatprep.subr.mxu0 0.0
    %298 = vmatpush1.msra.mxu0 0.0
    %299 = vmatprep.subr.mxu0 0.0
    %300 = vmatpush1.msra.mxu0 0.0
    %301 = vmatprep.subr.mxu0 0.0
    %302 = vmatpush1.msra.mxu0 0.0
    %303 = vmatprep.subr.mxu0 0.0
    %304 = vmatpush1.msra.mxu0 0.0
    %305 = vmatprep.subr.mxu0 0.0
    %306 = vmatpush1.msra.mxu0 0.0
    %307 = vmatprep.mubr.f32.mxu0 0.0
    %308 = vmatmul.mubr.f32.gmra.mrb[0].mxu0 %v238
    %v309 = vpop.f32.mrb[0].mxu0
    %v310 = vadd.f32 1.0, %v309
    %v311 = vpop.f32.mrb[0].mxu0
    %312 = vmatprep.mubr.f32.mxu0 0.0
    %313 = vmatmul.mubr.f32.gmra.mrb[0].mxu0 %v241
    %v314 = vpop.f32.mrb[0].mxu0
    %v315 = vadd.f32 1.0, %v314
    %v316 = vpop.f32.mrb[0].mxu0
    %317 = vdwg.mxu0
    %v318 = vmax.f32 %v310, 0.0
    %v319 = vmax.f32 %v315, 0.0
    %vm320 = vcmp.gt.f32.partialorder %v318, 0.0
    %vm321 = vcmp.gt.f32.partialorder %v319, 0.0
    %v322 = vrsqrt.pop %v318
    %v323 = vrsqrt.pop %v319
    %v324 = vsel %vm320, %v322, 0.0
    %v325 = vsel %vm321, %v323, 0.0
    %327 = vset.pattern.permute.xlu0 0
    %328 = vperm.xlu0 %327, %v324
    %v329 = vpop.permute.xlu0 %328
    %332 = vset.pattern.permute.xlu0 0
    %333 = vperm.xlu0 %332, %v325
    %v334 = vpop.permute.xlu0 %333
    %v336 = vmul.f32 %v329, %v235
    %v337 = vmul.f32 %v334, %v236
    %v338 = vmul.f32 %v233, %v324
    %v339 = vmul.f32 %v234, %v325
    %340 = vst.msk [vmem:[#allocation2] sm:$0xff] %vm31, %v336
    %341 = vst.msk [vmem:[#allocation2 + $0x8] sm:$0xff] %vm31, %v337
    %342 = vst.msk [vmem:[%s5] sm:$0xff] %vm137, %v338
    %343 = vst.msk [vmem:[%s5 + $0x8] sm:$0xff] %vm137, %v339
    %v344 = vld [vmem:[%s0] sm:$0xff]
    %v345 = vld [vmem:[%s0 + $0x8] sm:$0xff]
    %348 = vrot.lane.b32.xlu0 %v344, 127
    %v349 = vpop.permute.xlu0 %348
    %350 = vrot.lane.b32.xlu0 %v345, 127
    %v351 = vpop.permute.xlu0 %350
    %v354 = vmul.f32 %v338, %v349
    %v355 = vmul.f32 %v339, %v351
    %v356 = vmul.f32 %v324, %v324
    %v357 = vmul.f32 %v325, %v325
    %v358 = vmul.f32 %v356, %v349
    %v359 = vmul.f32 %v357, %v351
    %v361 = vsel %vm31, %v336, 0
    %v364 = vsel %vm31, %v337, 0
    %366 = vmatprep.subr.mxu0 0.0
    %367 = vmatpush1.msra.mxu0 %v354
    %368 = vmatprep.subr.mxu0 0.0
    %369 = vmatpush1.msra.mxu0 %v355
    %370 = vmatprep.subr.mxu0 0.0
    %371 = vmatpush1.msra.mxu0 0.0
    %372 = vmatprep.subr.mxu0 0.0
    %373 = vmatpush1.msra.mxu0 0.0
    %374 = vmatprep.subr.mxu0 0.0
    %375 = vmatpush1.msra.mxu0 0.0
    %376 = vmatprep.subr.mxu0 0.0
    %377 = vmatpush1.msra.mxu0 0.0
    %378 = vmatprep.subr.mxu0 0.0
    %379 = vmatpush1.msra.mxu0 0.0
    %380 = vmatprep.subr.mxu0 0.0
    %381 = vmatpush1.msra.mxu0 0.0
    %382 = vmatprep.subr.mxu0 0.0
    %383 = vmatpush1.msra.mxu0 0.0
    %384 = vmatprep.subr.mxu0 0.0
    %385 = vmatpush1.msra.mxu0 0.0
    %386 = vmatprep.subr.mxu0 0.0
    %387 = vmatpush1.msra.mxu0 0.0
    %388 = vmatprep.subr.mxu0 0.0
    %389 = vmatpush1.msra.mxu0 0.0
    %390 = vmatprep.subr.mxu0 0.0
    %391 = vmatpush1.msra.mxu0 0.0
    %392 = vmatprep.subr.mxu0 0.0
    %393 = vmatpush1.msra.mxu0 0.0
    %394 = vmatprep.subr.mxu0 0.0
    %395 = vmatpush1.msra.mxu0 0.0
    %396 = vmatprep.subr.mxu0 0.0
    %397 = vmatpush1.msra.mxu0 0.0
    %398 = vmatprep.subr.mxu0 0.0
    %399 = vmatpush1.msra.mxu0 0.0
    %400 = vmatprep.subr.mxu0 0.0
    %401 = vmatpush1.msra.mxu0 0.0
    %402 = vmatprep.subr.mxu0 0.0
    %403 = vmatpush1.msra.mxu0 0.0
    %404 = vmatprep.subr.mxu0 0.0
    %405 = vmatpush1.msra.mxu0 0.0
    %406 = vmatprep.subr.mxu0 0.0
    %407 = vmatpush1.msra.mxu0 0.0
    %408 = vmatprep.subr.mxu0 0.0
    %409 = vmatpush1.msra.mxu0 0.0
    %410 = vmatprep.subr.mxu0 0.0
    %411 = vmatpush1.msra.mxu0 0.0
    %412 = vmatprep.subr.mxu0 0.0
    %413 = vmatpush1.msra.mxu0 0.0
    %414 = vmatprep.subr.mxu0 0.0
    %415 = vmatpush1.msra.mxu0 0.0
    %416 = vmatprep.subr.mxu0 0.0
    %417 = vmatpush1.msra.mxu0 0.0
    %418 = vmatprep.subr.mxu0 0.0
    %419 = vmatpush1.msra.mxu0 0.0
    %420 = vmatprep.subr.mxu0 0.0
    %421 = vmatpush1.msra.mxu0 0.0
    %422 = vmatprep.subr.mxu0 0.0
    %423 = vmatpush1.msra.mxu0 0.0
    %424 = vmatprep.subr.mxu0 0.0
    %425 = vmatpush1.msra.mxu0 0.0
    %426 = vmatprep.subr.mxu0 0.0
    %427 = vmatpush1.msra.mxu0 0.0
    %428 = vmatprep.subr.mxu0 0.0
    %429 = vmatpush1.msra.mxu0 0.0
    %430 = vmatprep.mubr.f32.mxu0 0.0
    %431 = vmatmul.mubr.f32.gmra.mrb[0].mxu0 %v361
    %v432 = vpop.f32.mrb[0].mxu0
    %v433 = vadd.f32 %v358, %v432
    %v434 = vpop.f32.mrb[0].mxu0
    %435 = vmatprep.mubr.f32.mxu0 0.0
    %436 = vmatmul.mubr.f32.gmra.mrb[0].mxu0 %v364
    %v437 = vpop.f32.mrb[0].mxu0
    %v438 = vadd.f32 %v359, %v437
    %v439 = vpop.f32.mrb[0].mxu0
    %440 = vdwg.mxu0
    %443 = vrot.lane.b32.xlu0 %v433, 1
    %v444 = vpop.permute.xlu0 %443
    %445 = vrot.lane.b32.xlu0 %v438, 1
    %v446 = vpop.permute.xlu0 %445
    %vm449 = vcmask 15368
    %450 = vst.msk [vmem:[%s3] sm:$0xff] %vm449, %v444
    %451 = vst.msk [vmem:[%s3 + $0x8] sm:$0xff] %vm449, %v446
    // Predicated region
    $region14: #{tpu_custom_call.1} parent=1 // pred_check
      _
    $region15: #{tpu_custom_call.1} parent=1 // pred_check_branch
      %453 = sbr.rel (0) target = $region17
    $region16: #{tpu_custom_call.1} parent=1 // pred_region
      _
    $region17: #{tpu_custom_call.1} parent=1 // pred_fallthru
      _
    // Predicated region
    $region18: #{tpu_custom_call.1} parent=1 // pred_check
      _
    $region19: #{tpu_custom_call.1} parent=1 // pred_check_branch
      %455 = sbr.rel (0) target = $region21
    $region20: #{tpu_custom_call.1} parent=1 // pred_region
      %s457 = ssub.s32 256, 256
      %458 = vsyncadd [#allocation3], %s457
      %s459 = sshll.u32 [#allocation2], 4
      %s460 = int_to_ptr.vmem [resolvable:$true] %s459
      %465 = dma.vmem_to_hbm [thread:$0]  %s460, 256, %s4, [#allocation3], 128, 128, 8
    $region21: #{tpu_custom_call.1} parent=1 // pred_fallthru
      _
    // Predicated region
    $region22: #{tpu_custom_call.1} parent=1 // pred_check
      _
    $region23: #{tpu_custom_call.1} parent=1 // pred_check_branch
      %467 = sbr.rel (0) target = $region25
    $region24: #{tpu_custom_call.1} parent=1 // pred_region
      _
    $region25: #{tpu_custom_call.1} parent=1 // pred_fallthru
      _
    // Predicated region
    $region26: #{tpu_custom_call.1} parent=1 // pred_check
      _
    $region27: #{tpu_custom_call.1} parent=1 // pred_check_branch
      %469 = sbr.rel (0) target = $region29
    $region28: #{tpu_custom_call.1} parent=1 // pred_region
      _
    $region29: #{tpu_custom_call.1} parent=1 // pred_fallthru
      _
    // Predicated region
    $region30: #{tpu_custom_call.1} parent=1 // pred_check
      _
    $region31: #{tpu_custom_call.1} parent=1 // pred_check_branch
      %471 = sbr.rel (0) target = $region33
    $region32: #{tpu_custom_call.1} parent=1 // pred_region
      %472 = dma.done [#allocation3], 256
    $region33: #{tpu_custom_call.1} parent=1 // pred_fallthru
      _
    // Predicated region
    $region34: #{tpu_custom_call.1} parent=1 // pred_check
      _
    $region35: #{tpu_custom_call.1} parent=1 // pred_check_branch
      %474 = sbr.rel (0) target = $region37
    $region36: #{tpu_custom_call.1} parent=1 // pred_region
      _
    $region37: #{tpu_custom_call.1} parent=1 // pred_fallthru
      _
    %475 = vsyncpa [#allocation3], 1

</llo_original>
